<compile_context>
chip_gen: v7x
topology: tpu7x:2x2x1
jax: 0.10.0
libtpu: 0.0.40
codegen_flags: <defaults>
</compile_context>

<pallas_src>
import functools

import jax
import jax.numpy as jnp
from jax.experimental import pallas as pl
from jax.experimental.pallas import tpu as pltpu

D_IN, D_OUT = 84, 10


def _f5_kernel(x_ref, w_ref, b_ref, o_ref):
    # Linear: (TB, 84) @ (84, 10) + (1, 10) -> (TB, 10), accumulate in f32 on MXU.
    logits = jnp.dot(x_ref[...], w_ref[...],
                     preferred_element_type=jnp.float32) + b_ref[...]
    # Numerically-stable LogSoftmax over the last axis (all math in f32).
    # Rows are independent, so the undefined rows of a ragged final batch tile
    # cannot contaminate valid rows, and their stores are masked by Pallas.
    m = jnp.max(logits, axis=-1, keepdims=True)
    shifted = logits - m
    lse = jnp.log(jnp.sum(jnp.exp(shifted), axis=-1, keepdims=True))
    o_ref[...] = (shifted - lse).astype(o_ref.dtype)
    # TODO(synk): if profiling on v7x/v5e shows the 10-lane masked stores /
    # 128-lane softmax vregs (not HBM reads) as the binding slot, switch to a
    # batch-on-lanes transposed layout: dot_general -> (10, TB), reduce over
    # sublanes, write a lane-dense slab, transpose in the wrapper.


def _round_up(n, m):
    return ((n + m - 1) // m) * m


def _tpu_gen_params():
    """Returns (tensorcores_per_chip, block_b cap, vmem_limit_bytes)."""
    try:
        kind = jax.devices()[0].device_kind.lower()
    except Exception:
        kind = ""
    if "v7" in kind:
        # 2 TCs/chip, 64 MiB VMEM/TC. 16384-row tiles: lane-padded x+out
        # double-buffered footprint ~32 MiB, under the 48 MiB limit requested.
        return 2, 16384, 48 << 20
    if "v5" in kind:
        # Single TC, 128 MiB VMEM. 8192-row tiles need ~16 MiB lane-padded
        # (above the 16 MiB default scoped limit), so raise the limit.
        return 1, 8192, 64 << 20
    if "v6" in kind:
        # Single TC, 128 MiB VMEM; ~16 MiB lane-padded footprint at 8192 rows.
        return 1, 8192, 64 << 20
    # Unknown generation: conservative cap / limit, assume megacore split.
    return 2, 4096, 32 << 20


def _choose_block_b(B, cores, cap):
    if cores >= 2 and B >= 4096:
        # Megacore: keep >= 8 total grid steps (>= 4 per TensorCore) so each
        # core's double-buffered BlockSpec pipeline can hide DMA latency.
        return max(8, min(cap, _round_up(pl.cdiv(B, 8), 8)))
    # Single TensorCore (v5e/v6e) or small batch: one full-size tile when it
    # fits; an extra grid step would be pure ~0.35 us overhead.
    return max(8, min(cap, _round_up(B, 8)))


@functools.partial(jax.jit, static_argnames=("block_b", "vmem_limit"))
def _f5_pallas(x, w, b2d, *, block_b, vmem_limit):
    B, _ = x.shape
    # Ragged final block (B not a multiple of block_b) is handled by Pallas:
    # out-of-range output rows are masked on store, no wrapper pad needed.
    grid = (pl.cdiv(B, block_b),)
    cost = pl.CostEstimate(
        flops=2 * B * D_IN * D_OUT,
        transcendentals=B * D_OUT + B,          # exp per element + log per row
        bytes_accessed=(B * D_IN * 4) + (D_IN * D_OUT * 4) + (D_OUT * 4)
                       + (B * D_OUT * 4),
    )
    return pl.pallas_call(
        _f5_kernel,
        out_shape=jax.ShapeDtypeStruct((B, D_OUT), jnp.float32),
        grid_spec=pl.GridSpec(
            grid=grid,
            in_specs=[
                pl.BlockSpec((block_b, D_IN), lambda i: (i, 0)),   # x tile
                pl.BlockSpec((D_IN, D_OUT), lambda i: (0, 0)),     # resident weight
                pl.BlockSpec((1, D_OUT), lambda i: (0, 0)),        # resident bias
            ],
            out_specs=pl.BlockSpec((block_b, D_OUT), lambda i: (i, 0)),
        ),
        compiler_params=pltpu.CompilerParams(
            dimension_semantics=("parallel",),
            vmem_limit_bytes=vmem_limit,
        ),
        cost_estimate=cost,
    )(x, w, b2d)


def f5_forward(x, w, b):
    """x: (B, 84) f32, w: (84, 10) f32, b: (10,) f32 -> (B, 10) f32 log-probs."""
    B, _ = x.shape
    cores, cap, vmem_limit = _tpu_gen_params()
    block_b = _choose_block_b(B, cores, cap)
    return _f5_pallas(x, w, b.reshape(1, D_OUT), block_b=block_b,
                      vmem_limit=vmem_limit)


if __name__ == "__main__":
    key = jax.random.PRNGKey(0)
    kx, kw, kb, kx2, kx3 = jax.random.split(key, 5)

    # Deterministic synthetic parameters (shapes follow nn.Linear(84, 10)).
    # PyTorch default init: U(-1/sqrt(in), 1/sqrt(in)).
    bound = 1.0 / jnp.sqrt(jnp.float32(D_IN))
    w = jax.random.uniform(kw, (D_IN, D_OUT), jnp.float32, -bound, bound)
    b = jax.random.uniform(kb, (D_OUT,), jnp.float32, -bound, bound)

    # Small test: single-tile path.
    B1 = 8
    x1 = jax.random.normal(kx, (B1, D_IN), jnp.float32)
    out1 = f5_forward(x1, w, b)
    jax.block_until_ready(out1)
    ref1 = jax.nn.log_softmax(x1 @ w + b, axis=-1)
    assert out1.shape == (B1, D_OUT)
    assert jnp.allclose(out1, ref1, atol=1e-5, rtol=1e-5)

    # Non-multiple-of-8 batch: single ragged tile, masked final stores.
    B2 = 100
    x2 = jax.random.normal(kx2, (B2, D_IN), jnp.float32)
    out2 = f5_forward(x2, w, b)
    jax.block_until_ready(out2)
    ref2 = jax.nn.log_softmax(x2 @ w + b, axis=-1)
    assert out2.shape == (B2, D_OUT)
    assert jnp.allclose(out2, ref2, atol=1e-5, rtol=1e-5)

    # Multi-step grid with a ragged final block (forced small block_b so the
    # pipelined / boundary-masked path is exercised at a small shape).
    B3 = 300
    x3 = jax.random.normal(kx3, (B3, D_IN), jnp.float32)
    out3 = _f5_pallas(x3, w, b.reshape(1, D_OUT), block_b=128,
                      vmem_limit=32 << 20)
    jax.block_until_ready(out3)
    ref3 = jax.nn.log_softmax(x3 @ w + b, axis=-1)
    assert out3.shape == (B3, D_OUT)
    assert jnp.allclose(out3, ref3, atol=1e-5, rtol=1e-5)

    print("KERNEL_OK")
</pallas_src>

<mosaic_0001>
module attributes {stable_mosaic.version = 11 : i64} {
  func.func @_f5_kernel(%arg0: i32, %arg1: memref<8x84xf32, #tpu.memory_space<vmem>>, %arg2: memref<84x10xf32, #tpu.memory_space<vmem>>, %arg3: memref<1x10xf32, #tpu.memory_space<vmem>>, %arg4: memref<8x10xf32, #tpu.memory_space<vmem>>) attributes {dimension_semantics = [#tpu.dimension_semantics<parallel>], iteration_bounds = array<i64: 1>, scalar_prefetch = 0 : i64, scratch_operands = 0 : i64, tpu.core_type = #tpu.core_type<tc>, window_params = [{transform_indices = @transform_0, window_bounds = array<i64: 8, 84>}, {pipeline_mode = #tpu.pipeline_mode<synchronous>, transform_indices = @transform_1, window_bounds = array<i64: 84, 10>}, {pipeline_mode = #tpu.pipeline_mode<synchronous>, transform_indices = @transform_2, window_bounds = array<i64: 1, 10>}, {transform_indices = @transform_3, window_bounds = array<i64: 8, 10>}]} {
    %c0 = arith.constant 0 : index
    %c0_0 = arith.constant 0 : index
    %0 = vector.load %arg1[%c0, %c0_0] : memref<8x84xf32, #tpu.memory_space<vmem>>, vector<8x84xf32>
    %c0_1 = arith.constant 0 : index
    %c0_2 = arith.constant 0 : index
    %1 = vector.load %arg2[%c0_1, %c0_2] : memref<84x10xf32, #tpu.memory_space<vmem>>, vector<84x10xf32>
    %cst = arith.constant dense<0.000000e+00> : vector<8x10xf32>
    %2 = tpu.matmul %0, %1, %cst {dimension_numbers = #tpu.dot_dimension_numbers<[1], [0], [0], [1], [0, 0, 1, 1], [], []>} : vector<8x84xf32>, vector<84x10xf32>, vector<8x10xf32> -> vector<8x10xf32>
    %c0_3 = arith.constant 0 : index
    %c0_4 = arith.constant 0 : index
    %3 = vector.load %arg3[%c0_3, %c0_4] : memref<1x10xf32, #tpu.memory_space<vmem>>, vector<1x10xf32>
    %4 = vector.broadcast %3 : vector<1x10xf32> to vector<8x10xf32>
    %5 = arith.addf %2, %4 : vector<8x10xf32>
    %cst_5 = arith.constant dense<0xFF800000> : vector<8xf32>
    %6 = vector.multi_reduction <maximumf>, %5, %cst_5 [1] : vector<8x10xf32> to vector<8xf32>
    %7 = vector.shape_cast %6 : vector<8xf32> to vector<8x1xf32>
    %8 = vector.broadcast %7 : vector<8x1xf32> to vector<8x10xf32>
    %9 = arith.subf %5, %8 : vector<8x10xf32>
    %10 = math.exp %9 : vector<8x10xf32>
    %cst_6 = arith.constant dense<0.000000e+00> : vector<8xf32>
    %11 = vector.multi_reduction <add>, %10, %cst_6 [1] : vector<8x10xf32> to vector<8xf32>
    %12 = vector.shape_cast %11 : vector<8xf32> to vector<8x1xf32>
    %13 = math.log %12 : vector<8x1xf32>
    %14 = vector.broadcast %13 : vector<8x1xf32> to vector<8x10xf32>
    %15 = arith.subf %9, %14 : vector<8x10xf32>
    %c0_7 = arith.constant 0 : index
    %c0_8 = arith.constant 0 : index
    %16 = vector.load %arg4[%c0_7, %c0_8] : memref<8x10xf32, #tpu.memory_space<vmem>>, vector<8x10xf32>
    tpu.vector_store %arg4[%c0_7, %c0_8], %15 {strides = array<i32>} : memref<8x10xf32, #tpu.memory_space<vmem>>, vector<8x10xf32>,
    return
  }
  func.func @transform_0(%arg0: i32) -> (i32, i32) {
    %c0_i32 = arith.constant 0 : i32
    %c0_i32_0 = arith.constant 0 : i32
    return %arg0, %c0_i32 : i32, i32
  }
  func.func @transform_1(%arg0: i32) -> (i32, i32) {
    %c0_i32 = arith.constant 0 : i32
    %c0_i32_0 = arith.constant 0 : i32
    %c0_i32_1 = arith.constant 0 : i32
    return %c0_i32, %c0_i32_0 : i32, i32
  }
  func.func @transform_2(%arg0: i32) -> (i32, i32) {
    %c0_i32 = arith.constant 0 : i32
    %c0_i32_0 = arith.constant 0 : i32
    %c0_i32_1 = arith.constant 0 : i32
    return %c0_i32, %c0_i32_0 : i32, i32
  }
  func.func @transform_3(%arg0: i32) -> (i32, i32) {
    %c0_i32 = arith.constant 0 : i32
    %c0_i32_0 = arith.constant 0 : i32
    return %arg0, %c0_i32 : i32, i32
  }
}

</mosaic_0001>

<llo_original>
// kernel: _f5_pallas.1
$region0: #{_f5_pallas.1}
  #allocation0 [shape = 'u32[]', space=smem, size = 0x4, offset = 0x4, fixed_abs, tag = 'smem constant byte address 0x4 - core index']
  #allocation1 [shape = 'u32[144,128]{1,0:T(1,128)}', space=vmem, size = 0x12000, scoped, tag = 'internal scratch']
  %s0 = inlined_call_operand.vmem [shape: f32[8,84], index: 0, kind: input, shape index: {}]
  %s1 = inlined_call_operand.vmem [shape: f32[84,10], index: 1, kind: input, shape index: {}]
  %s2 = inlined_call_operand.vmem [shape: f32[1,10], index: 2, kind: input, shape index: {}]
  %s3 = inlined_call_operand.hbm [shape: f32[8,10], index: 3, kind: output, shape index: {}]
  %s4 = sld [smem:[#allocation0]]
  $region22: #{_f5_pallas.1} parent=0
    _
  %s6 = ssub.s32 1, %s4
  %s7 = scalar_select 0, %s6, %s4
  $region1: #{_f5_pallas.1} parent=0
    #allocation2 [shape = 'u8[4096]{0}', space=vmem, size = 0x1000, scoped, tag = 'output window, operand 0, single buffered']
    #allocation3 [shape = 's32[1]{0}', space=sflag, size = 0x4, scoped, tag = 'scoped memory for _f5_pallas.1']
    %8 = vsyncpa [#allocation3], 0
    // Predicated region
    $region2: #{_f5_pallas.1} parent=1 // pred_check
      _
    $region3: #{_f5_pallas.1} parent=1 // pred_check_branch
      %10 = sbr.rel (0) target = $region5
    $region4: #{_f5_pallas.1} parent=1 // pred_region
      _
    $region5: #{_f5_pallas.1} parent=1 // pred_fallthru
      _
    // Predicated region
    $region6: #{_f5_pallas.1} parent=1 // pred_check
      _
    $region7: #{_f5_pallas.1} parent=1 // pred_check_branch
      %12 = sbr.rel (0) target = $region9
    $region8: #{_f5_pallas.1} parent=1 // pred_region
      _
    $region9: #{_f5_pallas.1} parent=1 // pred_fallthru
      _
    // Predicated region
    $region10: #{_f5_pallas.1} parent=1 // pred_check
      _
    $region11: #{_f5_pallas.1} parent=1 // pred_check_branch
      %14 = sbr.rel (0) target = $region13
    $region12: #{_f5_pallas.1} parent=1 // pred_region
      _
    $region13: #{_f5_pallas.1} parent=1 // pred_fallthru
      _
    %v15 = vld [vmem:[%s0] sm:$0xff]
    %v16 = vld [vmem:[%s1] sm:$0xff]
    %v17 = vld [vmem:[%s1 + $0x8] sm:$0xff]
    %v18 = vld [vmem:[%s1 + $0x10] sm:$0xff]
    %v19 = vld [vmem:[%s1 + $0x18] sm:$0xff]
    %v20 = vld [vmem:[%s1 + $0x20] sm:$0xff]
    %v21 = vld [vmem:[%s1 + $0x28] sm:$0xff]
    %v22 = vld [vmem:[%s1 + $0x30] sm:$0xff]
    %v23 = vld [vmem:[%s1 + $0x38] sm:$0xff]
    %v24 = vld [vmem:[%s1 + $0x40] sm:$0xff]
    %v25 = vld [vmem:[%s1 + $0x48] sm:$0xff]
    %v26 = vld [vmem:[%s1 + $0x50] sm:$0xf]
    %v27 = vld [vmem:[%s2] sm:$0x1]
    %v29 = vlaneseq
    %v30 = vshrl.u32 %v29, 7
    %v31 = vsub.s32 0, %v30
    %v32 = vrot.slane %v27, %v31
    %vm34 = vcmask 687104
    %v36 = vsel %vm34, %v15, 0
    %vm38 = vcmask 1043456
    %v40 = vsel %vm38, %v26, 0
    %42 = vmatprep.subr.mxu0 0.0
    %43 = vmatpush1.msra.mxu0 %v16
    %44 = vmatprep.subr.mxu0 0.0
    %45 = vmatpush1.msra.mxu0 %v17
    %46 = vmatprep.subr.mxu0 0.0
    %47 = vmatpush1.msra.mxu0 %v18
    %48 = vmatprep.subr.mxu0 0.0
    %49 = vmatpush1.msra.mxu0 %v19
    %50 = vmatprep.subr.mxu0 0.0
    %51 = vmatpush1.msra.mxu0 %v20
    %52 = vmatprep.subr.mxu0 0.0
    %53 = vmatpush1.msra.mxu0 %v21
    %54 = vmatprep.subr.mxu0 0.0
    %55 = vmatpush1.msra.mxu0 %v22
    %56 = vmatprep.subr.mxu0 0.0
    %57 = vmatpush1.msra.mxu0 %v23
    %58 = vmatprep.subr.mxu0 0.0
    %59 = vmatpush1.msra.mxu0 %v24
    %60 = vmatprep.subr.mxu0 0.0
    %61 = vmatpush1.msra.mxu0 %v25
    %62 = vmatprep.subr.mxu0 0.0
    %63 = vmatpush1.msra.mxu0 %v40
    %64 = vmatprep.subr.mxu0 0.0
    %65 = vmatpush1.msra.mxu0 0.0
    %66 = vmatprep.subr.mxu0 0.0
    %67 = vmatpush1.msra.mxu0 0.0
    %68 = vmatprep.subr.mxu0 0.0
    %69 = vmatpush1.msra.mxu0 0.0
    %70 = vmatprep.subr.mxu0 0.0
    %71 = vmatpush1.msra.mxu0 0.0
    %72 = vmatprep.subr.mxu0 0.0
    %73 = vmatpush1.msra.mxu0 0.0
    %74 = vmatprep.subr.mxu0 0.0
    %75 = vmatpush1.msra.mxu0 0.0
    %76 = vmatprep.subr.mxu0 0.0
    %77 = vmatpush1.msra.mxu0 0.0
    %78 = vmatprep.subr.mxu0 0.0
    %79 = vmatpush1.msra.mxu0 0.0
    %80 = vmatprep.subr.mxu0 0.0
    %81 = vmatpush1.msra.mxu0 0.0
    %82 = vmatprep.subr.mxu0 0.0
    %83 = vmatpush1.msra.mxu0 0.0
    %84 = vmatprep.subr.mxu0 0.0
    %85 = vmatpush1.msra.mxu0 0.0
    %86 = vmatprep.subr.mxu0 0.0
    %87 = vmatpush1.msra.mxu0 0.0
    %88 = vmatprep.subr.mxu0 0.0
    %89 = vmatpush1.msra.mxu0 0.0
    %90 = vmatprep.subr.mxu0 0.0
    %91 = vmatpush1.msra.mxu0 0.0
    %92 = vmatprep.subr.mxu0 0.0
    %93 = vmatpush1.msra.mxu0 0.0
    %94 = vmatprep.subr.mxu0 0.0
    %95 = vmatpush1.msra.mxu0 0.0
    %96 = vmatprep.subr.mxu0 0.0
    %97 = vmatpush1.msra.mxu0 0.0
    %98 = vmatprep.subr.mxu0 0.0
    %99 = vmatpush1.msra.mxu0 0.0
    %100 = vmatprep.subr.mxu0 0.0
    %101 = vmatpush1.msra.mxu0 0.0
    %102 = vmatprep.subr.mxu0 0.0
    %103 = vmatpush1.msra.mxu0 0.0
    %104 = vmatprep.subr.mxu0 0.0
    %105 = vmatpush1.msra.mxu0 0.0
    %106 = vmatprep.mubr.f32.mxu0 0.0
    %107 = vmatmul.mubr.f32.gmra.mrb[0].mxu0 %v36
    %v108 = vpop.f32.mrb[0].mxu0
    %v109 = vadd.f32 %v32, %v108
    %v110 = vpop.f32.mrb[0].mxu0
    %111 = vdwg.mxu0
    %vm112 = vcmask 80896
    %v113 = vsel %vm112, %v109, -inf
    %114 = vmax.xlane.f32.xlu0 %v113
    %v115 = vpop.xlane.xlu0 %114
    %v116 = vsub.f32 %v109, %v115
    %v117 = vmul.f32 %v116, 1.442695
    %v118 = vpow.pop %v117
    %v119 = vsel %vm112, %v118, 0.0
    %120 = vadd.xlane.f32.xlu0 %v119
    %v121 = vpop.xlane.xlu0 %120
    %v122 = vlog2.pop %v121
    %v123 = vmul.f32 %v122, 0.6931472
    %v124 = vsub.f32 %v116, %v123
    %125 = vst.msk [vmem:[#allocation2] sm:$0xff] %vm112, %v124
    // Predicated region
    $region14: #{_f5_pallas.1} parent=1 // pred_check
      _
    $region15: #{_f5_pallas.1} parent=1 // pred_check_branch
      %127 = sbr.rel (0) target = $region17
    $region16: #{_f5_pallas.1} parent=1 // pred_region
      %s129 = ssub.s32 128, 128
      %130 = vsyncadd [#allocation3], %s129
      %s132 = sshll.u32 [#allocation2], 4
      %s133 = int_to_ptr.vmem [resolvable:$true] %s132
      %135 = dma.vmem_to_hbm [thread:$0]  %s133, 128, %s3, [#allocation3]
    $region17: #{_f5_pallas.1} parent=1 // pred_fallthru
      _
    // Predicated region
    $region18: #{_f5_pallas.1} parent=1 // pred_check
      _
    $region19: #{_f5_pallas.1} parent=1 // pred_check_branch
      %137 = sbr.rel (0) target = $region21
    $region20: #{_f5_pallas.1} parent=1 // pred_region
      %138 = dma.done [#allocation3], 128
    $region21: #{_f5_pallas.1} parent=1 // pred_fallthru
      _
    %139 = vsyncpa [#allocation3], 1

</llo_original>
